<compile_context>
chip_gen: v7x
topology: tpu7x:2x2x1
jax: 0.10.0
libtpu: 0.0.40
codegen_flags: <defaults>
</compile_context>

<pallas_src>
import functools

import jax
import jax.numpy as jnp
from jax.experimental import pallas as pl
from jax.experimental.pallas import tpu as pltpu


def _round_up(x, m):
    return (x + m - 1) // m * m


# ---------------------------------------------------------------------------
# Pallas kernel: one (batch, M-tile, Cout-tile) -> fat-K matmul + BN + ReLU
# ---------------------------------------------------------------------------

def _im2col_bn_relu_kernel(p_ref, w_ref, s_ref, b_ref, o_ref):
    """p_ref: (1, TM, Kp) bf16 im2col patches (lane-dense, K padded to 128x)
       w_ref: (Kp, 128)   bf16 weights (Cout padded to 128 multiple)
       s_ref, b_ref: (1, 128) f32 folded BN scale / bias
       o_ref: (1, TM, 128) output tile (full-lane stores)."""
    acc = jnp.dot(p_ref[0], w_ref[...], preferred_element_type=jnp.float32)
    out = jnp.maximum(acc * s_ref[...] + b_ref[...], 0.0)   # f32 epilogue
    o_ref[0] = out.astype(o_ref.dtype)


# ---------------------------------------------------------------------------
# Wrapper: BasicConv2d forward (conv, bias=False -> BatchNorm -> ReLU)
# ---------------------------------------------------------------------------

def basic_conv2d(x, w, gamma, beta, running_mean, running_var, *,
                 stride=1, padding=0, dilation=1, eps=1e-5, tm=256):
    """x: (N, H, W, Cin), w: (KH, KW, Cin, Cout) -> (N, Ho, Wo, Cout)."""
    N, H, W, Cin = x.shape
    KH, KW, _, Cout = w.shape
    sh = sw = int(stride)
    ph = pw = int(padding)
    dh = dw = int(dilation)
    Ho = (H + 2 * ph - dh * (KH - 1) - 1) // sh + 1
    Wo = (W + 2 * pw - dw * (KW - 1) - 1) // sw + 1

    # ---- im2col in plain JAX (XLA fuses pad + strided slices + concat) ----
    xp = jnp.pad(x, ((0, 0), (ph, ph), (pw, pw), (0, 0)))
    taps = []
    for ky in range(KH):
        for kx in range(KW):
            y0, x0 = ky * dh, kx * dw
            taps.append(jax.lax.slice(
                xp,
                (0, y0, x0, 0),
                (N, y0 + (Ho - 1) * sh + 1, x0 + (Wo - 1) * sw + 1, Cin),
                (1, sh, sw, 1)))
    K = KH * KW * Cin
    cols = jnp.concatenate(taps, axis=-1).reshape(N, Ho * Wo, K)

    # ---- pad to lane-dense / MXU-friendly shapes ----
    Kp = _round_up(K, 128)
    Cp = _round_up(Cout, 128)
    M = Ho * Wo
    TM = min(tm, _round_up(M, 8))
    Mp = _round_up(M, TM)

    cols = jnp.pad(cols, ((0, 0), (0, Mp - M), (0, Kp - K))).astype(jnp.bfloat16)
    wp = jnp.pad(w.reshape(K, Cout),
                 ((0, Kp - K), (0, Cp - Cout))).astype(jnp.bfloat16)

    # Fold BatchNorm (inference mode) into per-channel scale/bias, keep in f32.
    scale = gamma / jnp.sqrt(running_var + eps)
    bias = beta - running_mean * scale
    s2 = jnp.pad(scale, (0, Cp - Cout)).reshape(1, Cp).astype(jnp.float32)
    b2 = jnp.pad(bias, (0, Cp - Cout)).reshape(1, Cp).astype(jnp.float32)

    out = pl.pallas_call(
        _im2col_bn_relu_kernel,
        out_shape=jax.ShapeDtypeStruct((N, Mp, Cp), x.dtype),
        grid=(N, Mp // TM, Cp // 128),
        in_specs=[
            pl.BlockSpec((1, TM, Kp), lambda n, m, c: (n, m, 0)),
            pl.BlockSpec((Kp, 128), lambda n, m, c: (0, c)),
            pl.BlockSpec((1, 128), lambda n, m, c: (0, c)),
            pl.BlockSpec((1, 128), lambda n, m, c: (0, c)),
        ],
        out_specs=pl.BlockSpec((1, TM, 128), lambda n, m, c: (n, m, c)),
        compiler_params=pltpu.CompilerParams(
            dimension_semantics=("parallel", "parallel", "parallel")),
    )(cols, wp, s2, b2)

    return out[:, :M, :Cout].reshape(N, Ho, Wo, Cout)


# ---------------------------------------------------------------------------

if __name__ == "__main__":
    N, Cin, Cout, H, W = 2, 4, 8, 16, 16
    key = jax.random.PRNGKey(0)
    kx, kw, kg, kb, km, kv = jax.random.split(key, 6)

    x = jax.random.normal(kx, (N, H, W, Cin), jnp.float32)
    w = jax.random.normal(kw, (3, 3, Cin, Cout), jnp.float32) / jnp.sqrt(9.0 * Cin)
    gamma = 1.0 + 0.1 * jax.random.normal(kg, (Cout,), jnp.float32)
    beta = 0.1 * jax.random.normal(kb, (Cout,), jnp.float32)
    rmean = 0.1 * jax.random.normal(km, (Cout,), jnp.float32)
    rvar = 1.0 + 0.1 * jnp.abs(jax.random.normal(kv, (Cout,), jnp.float32))

    fwd = jax.jit(functools.partial(basic_conv2d, stride=1, padding=1, dilation=1))
    out = jax.block_until_ready(fwd(x, w, gamma, beta, rmean, rvar))

    assert out.shape == (N, H, W, Cout), out.shape
    assert jnp.all(jnp.isfinite(out))

    # Sanity-check against an f32 XLA conv reference (bf16 matmul => loose tol).
    ref = jax.lax.conv_general_dilated(
        x, w, window_strides=(1, 1), padding=((1, 1), (1, 1)),
        dimension_numbers=("NHWC", "HWIO", "NHWC"))
    rscale = gamma / jnp.sqrt(rvar + 1e-5)
    ref = jnp.maximum(ref * rscale + (beta - rmean * rscale), 0.0)
    assert jnp.allclose(out, ref, rtol=5e-2, atol=5e-2), \
        float(jnp.max(jnp.abs(out - ref)))

    print("KERNEL_OK")
</pallas_src>

<mosaic_0001>
module attributes {stable_mosaic.version = 11 : i64} {
  func.func @_im2col_bn_relu_kernel(%arg0: i32, %arg1: i32, %arg2: i32, %arg3: memref<1x256x128xbf16, #tpu.memory_space<vmem>>, %arg4: memref<128x128xbf16, #tpu.memory_space<vmem>>, %arg5: memref<1x128xf32, #tpu.memory_space<vmem>>, %arg6: memref<1x128xf32, #tpu.memory_space<vmem>>, %arg7: memref<1x256x128xf32, #tpu.memory_space<vmem>>) attributes {dimension_semantics = [#tpu.dimension_semantics<parallel>, #tpu.dimension_semantics<parallel>, #tpu.dimension_semantics<parallel>], iteration_bounds = array<i64: 2, 1, 1>, scalar_prefetch = 0 : i64, scratch_operands = 0 : i64, tpu.core_type = #tpu.core_type<tc>, window_params = [{transform_indices = @transform_0, window_bounds = array<i64: 1, 256, 128>}, {transform_indices = @transform_1, window_bounds = array<i64: 128, 128>}, {transform_indices = @transform_2, window_bounds = array<i64: 1, 128>}, {transform_indices = @transform_3, window_bounds = array<i64: 1, 128>}, {transform_indices = @transform_4, window_bounds = array<i64: 1, 256, 128>}]} {
    %c0 = arith.constant 0 : index
    %c0_0 = arith.constant 0 : index
    %c0_1 = arith.constant 0 : index
    %0 = vector.load %arg3[%c0, %c0_0, %c0_1] : memref<1x256x128xbf16, #tpu.memory_space<vmem>>, vector<1x256x128xbf16>
    %1 = vector.shape_cast %0 : vector<1x256x128xbf16> to vector<256x128xbf16>
    %c0_2 = arith.constant 0 : index
    %c0_3 = arith.constant 0 : index
    %2 = vector.load %arg4[%c0_2, %c0_3] : memref<128x128xbf16, #tpu.memory_space<vmem>>, vector<128x128xbf16>
    %cst = arith.constant dense<0.000000e+00> : vector<256x128xf32>
    %3 = tpu.matmul %1, %2, %cst {dimension_numbers = #tpu.dot_dimension_numbers<[1], [0], [0], [1], [0, 0, 1, 1], [], []>} : vector<256x128xbf16>, vector<128x128xbf16>, vector<256x128xf32> -> vector<256x128xf32>
    %c0_4 = arith.constant 0 : index
    %c0_5 = arith.constant 0 : index
    %4 = vector.load %arg5[%c0_4, %c0_5] : memref<1x128xf32, #tpu.memory_space<vmem>>, vector<1x128xf32>
    %5 = vector.broadcast %4 : vector<1x128xf32> to vector<256x128xf32>
    %6 = arith.mulf %3, %5 : vector<256x128xf32>
    %c0_6 = arith.constant 0 : index
    %c0_7 = arith.constant 0 : index
    %7 = vector.load %arg6[%c0_6, %c0_7] : memref<1x128xf32, #tpu.memory_space<vmem>>, vector<1x128xf32>
    %8 = vector.broadcast %7 : vector<1x128xf32> to vector<256x128xf32>
    %9 = arith.addf %6, %8 : vector<256x128xf32>
    %cst_8 = arith.constant 0.000000e+00 : f32
    %10 = vector.broadcast %cst_8 : f32 to vector<256x128xf32>
    %11 = arith.maximumf %9, %10 : vector<256x128xf32>
    %c0_9 = arith.constant 0 : index
    %c0_10 = arith.constant 0 : index
    %c0_11 = arith.constant 0 : index
    %12 = vector.load %arg7[%c0_9, %c0_10, %c0_11] : memref<1x256x128xf32, #tpu.memory_space<vmem>>, vector<1x256x128xf32>
    %13 = vector.shape_cast %12 : vector<1x256x128xf32> to vector<256x128xf32>
    %14 = vector.shape_cast %11 : vector<256x128xf32> to vector<1x256x128xf32>
    tpu.vector_store %arg7[%c0_9, %c0_10, %c0_11], %14 {strides = array<i32>} : memref<1x256x128xf32, #tpu.memory_space<vmem>>, vector<1x256x128xf32>,
    return
  }
  func.func @transform_0(%arg0: i32, %arg1: i32, %arg2: i32) -> (i32, i32, i32) {
    %c0_i32 = arith.constant 0 : i32
    %c0_i32_0 = arith.constant 0 : i32
    return %arg0, %arg1, %c0_i32 : i32, i32, i32
  }
  func.func @transform_1(%arg0: i32, %arg1: i32, %arg2: i32) -> (i32, i32) {
    %c0_i32 = arith.constant 0 : i32
    %c0_i32_0 = arith.constant 0 : i32
    return %c0_i32, %arg2 : i32, i32
  }
  func.func @transform_2(%arg0: i32, %arg1: i32, %arg2: i32) -> (i32, i32) {
    %c0_i32 = arith.constant 0 : i32
    %c0_i32_0 = arith.constant 0 : i32
    return %c0_i32, %arg2 : i32, i32
  }
  func.func @transform_3(%arg0: i32, %arg1: i32, %arg2: i32) -> (i32, i32) {
    %c0_i32 = arith.constant 0 : i32
    %c0_i32_0 = arith.constant 0 : i32
    return %c0_i32, %arg2 : i32, i32
  }
  func.func @transform_4(%arg0: i32, %arg1: i32, %arg2: i32) -> (i32, i32, i32) {
    %c0_i32 = arith.constant 0 : i32
    return %arg0, %arg1, %arg2 : i32, i32, i32
  }
}

</mosaic_0001>

<llo_original>
// kernel: basic_conv2d.1
$region0: #{basic_conv2d.1}
  #allocation0 [shape = 'u32[]', space=smem, size = 0x4, offset = 0x4, fixed_abs, tag = 'smem constant byte address 0x4 - core index']
  #allocation1 [shape = 'u32[144,128]{1,0:T(1,128)}', space=vmem, size = 0x12000, scoped, tag = 'internal scratch']
  %s0 = inlined_call_operand.vmem [shape: bf16[2,256,128], index: 0, kind: input, shape index: {}]
  %s1 = inlined_call_operand.vmem [shape: bf16[128,128], index: 1, kind: input, shape index: {}]
  %s2 = inlined_call_operand.vmem [shape: f32[1,128], index: 2, kind: input, shape index: {}]
  %s3 = inlined_call_operand.vmem [shape: f32[1,128], index: 3, kind: input, shape index: {}]
  %s4 = inlined_call_operand.vmem [shape: f32[2,256,128], index: 4, kind: output, shape index: {}]
  %s5 = sld [smem:[#allocation0]]
  $region49: #{basic_conv2d.1} parent=0
    _
  %s7 = ssub.s32 1, %s5
  %s8 = scalar_select 0, %s7, %s5
  loop: start=0, step=1, limit=4
  $region2: #{basic_conv2d.1} parent=0 // loop_pre_header
    _
  $region3: #{basic_conv2d.1} parent=0 // loop_header
    %s10 = sphi 0, %s14
    %p11 = scmp.ge.s32.totalorder %s10, 4
    %s17 = sphi 0, %s36
    %s18 = sphi 0, %s32
    %s19 = sphi 0, %s28
    %s20 = sphi 0, %s17
    %s21 = sphi 0, %s18
    %s22 = sphi 0, %s19
    %s23 = sphi 0, %s20
    %s24 = sphi 0, %s21
    %s25 = sphi 0, %s22
    %s41 = sphi 0, %s43
    %s44 = sphi 0, %s41
    %s45 = sphi 0, %s44
    %s61 = sphi 0, %s45
    %s67 = sphi 0, %s69
    %s70 = sphi 0, %s67
    %s71 = sphi 0, %s70
    %s87 = sphi 0, %s71
    %s93 = sphi 0, %s95
    %s96 = sphi 0, %s93
    %s97 = sphi 0, %s96
    %s113 = sphi 0, %s97
    %s119 = sphi 0, %s121
    %s122 = sphi 0, %s119
    %s123 = sphi 0, %s122
    %s139 = sphi 0, %s123
    %s149 = sphi 0, %s151
    %s152 = sphi 0, %s149
    %s153 = sphi 0, %s152
    %s169 = sphi 0, %s153
  $region4: #{basic_conv2d.1} parent=0 // loop_header_branch
    %13 = sbr.rel (%p11) target = $region8
  $region5: #{basic_conv2d.1} parent=0 // loop_body
    %s15 = ssub.s32 %s10, 1
    %s16 = ssub.s32 %s10, 2
    %s26 = sadd.s32 1, %s19
    %p27 = scmp.ge.s32.totalorder %s26, 1
    %s28 = scalar_select %p27, 0, %s26
    %s29 = sadd.s32 1, %s18
    %s30 = scalar_select %p27, %s29, %s18
    %p31 = scmp.ge.s32.totalorder %s30, 1
    %s32 = scalar_select %p31, 0, %s30
    %s33 = sadd.s32 1, %s17
    %s34 = scalar_select %p31, %s33, %s17
    %p35 = scmp.ge.s32.totalorder %s34, 2
    %s36 = scalar_select %p35, 0, %s34
    %s37 = ssub.s32 %s17, %s36
    %s38 = ssub.s32 %s18, %s32
    %s39 = sor.u32 %s37, %s38
    %p40 = scmp.eq.s32.totalorder %s39, 0
    %s42 = sadd.s32 %s41, 1
    %s43 = scalar_select %p40, %s41, %s42
    %p46 = pneg %p40
    %p47 = scmp.eq.s32.totalorder %s10, 1
    %p48 = por %p46, %p47
    %p49 = scmp.ne.s32.totalorder %s41, %s44
    %p50 = scmp.eq.s32.totalorder %s10, 0
    %p51 = por %p49, %p50
    %p52 = scmp.ne.s32.totalorder %s41, %s44
    %p53 = scmp.eq.s32.totalorder %s15, 1
    %p54 = por %p52, %p53
    %p55 = scmp.ne.s32.totalorder %s44, %s45
    %p56 = scmp.eq.s32.totalorder %s15, 0
    %p57 = por %p55, %p56
    %p58 = scmp.ne.s32.totalorder %s44, %s45
    %p59 = scmp.eq.s32.totalorder %s16, 1
    %p60 = por %p58, %p59
    %p62 = scmp.ne.s32.totalorder %s45, %s61
    %p63 = scmp.eq.s32.totalorder %s16, 0
    %p64 = por %p62, %p63
    %s65 = ssub.s32 %s19, %s28
    %p66 = scmp.eq.s32.totalorder %s65, 0
    %s68 = sadd.s32 %s67, 1
    %s69 = scalar_select %p66, %s67, %s68
    %p72 = pneg %p66
    %p73 = scmp.eq.s32.totalorder %s10, 1
    %p74 = por %p72, %p73
    %p75 = scmp.ne.s32.totalorder %s67, %s70
    %p76 = scmp.eq.s32.totalorder %s10, 0
    %p77 = por %p75, %p76
    %p78 = scmp.ne.s32.totalorder %s67, %s70
    %p79 = scmp.eq.s32.totalorder %s15, 1
    %p80 = por %p78, %p79
    %p81 = scmp.ne.s32.totalorder %s70, %s71
    %p82 = scmp.eq.s32.totalorder %s15, 0
    %p83 = por %p81, %p82
    %p84 = scmp.ne.s32.totalorder %s70, %s71
    %p85 = scmp.eq.s32.totalorder %s16, 1
    %p86 = por %p84, %p85
    %p88 = scmp.ne.s32.totalorder %s71, %s87
    %p89 = scmp.eq.s32.totalorder %s16, 0
    %p90 = por %p88, %p89
    %s91 = ssub.s32 %s19, %s28
    %p92 = scmp.eq.s32.totalorder %s91, 0
    %s94 = sadd.s32 %s93, 1
    %s95 = scalar_select %p92, %s93, %s94
    %p98 = pneg %p92
    %p99 = scmp.eq.s32.totalorder %s10, 1
    %p100 = por %p98, %p99
    %p101 = scmp.ne.s32.totalorder %s93, %s96
    %p102 = scmp.eq.s32.totalorder %s10, 0
    %p103 = por %p101, %p102
    %p104 = scmp.ne.s32.totalorder %s93, %s96
    %p105 = scmp.eq.s32.totalorder %s15, 1
    %p106 = por %p104, %p105
    %p107 = scmp.ne.s32.totalorder %s96, %s97
    %p108 = scmp.eq.s32.totalorder %s15, 0
    %p109 = por %p107, %p108
    %p110 = scmp.ne.s32.totalorder %s96, %s97
    %p111 = scmp.eq.s32.totalorder %s16, 1
    %p112 = por %p110, %p111
    %p114 = scmp.ne.s32.totalorder %s97, %s113
    %p115 = scmp.eq.s32.totalorder %s16, 0
    %p116 = por %p114, %p115
    %s117 = ssub.s32 %s19, %s28
    %p118 = scmp.eq.s32.totalorder %s117, 0
    %s120 = sadd.s32 %s119, 1
    %s121 = scalar_select %p118, %s119, %s120
    %p124 = pneg %p118
    %p125 = scmp.eq.s32.totalorder %s10, 1
    %p126 = por %p124, %p125
    %p127 = scmp.ne.s32.totalorder %s119, %s122
    %p128 = scmp.eq.s32.totalorder %s10, 0
    %p129 = por %p127, %p128
    %p130 = scmp.ne.s32.totalorder %s119, %s122
    %p131 = scmp.eq.s32.totalorder %s15, 1
    %p132 = por %p130, %p131
    %p133 = scmp.ne.s32.totalorder %s122, %s123
    %p134 = scmp.eq.s32.totalorder %s15, 0
    %p135 = por %p133, %p134
    %p136 = scmp.ne.s32.totalorder %s122, %s123
    %p137 = scmp.eq.s32.totalorder %s16, 1
    %p138 = por %p136, %p137
    %p140 = scmp.ne.s32.totalorder %s123, %s139
    %p141 = scmp.eq.s32.totalorder %s16, 0
    %p142 = por %p140, %p141
    %s143 = ssub.s32 %s17, %s36
    %s144 = ssub.s32 %s18, %s32
    %s145 = sor.u32 %s143, %s144
    %s146 = ssub.s32 %s19, %s28
    %s147 = sor.u32 %s145, %s146
    %p148 = scmp.eq.s32.totalorder %s147, 0
    %s150 = sadd.s32 %s149, 1
    %s151 = scalar_select %p148, %s149, %s150
    %p154 = pneg %p148
    %p155 = scmp.eq.s32.totalorder %s10, 1
    %p156 = por %p154, %p155
    %p157 = scmp.ne.s32.totalorder %s149, %s152
    %p158 = scmp.eq.s32.totalorder %s10, 0
    %p159 = por %p157, %p158
    %p160 = scmp.ne.s32.totalorder %s149, %s152
    %p161 = scmp.eq.s32.totalorder %s15, 1
    %p162 = por %p160, %p161
    %p163 = scmp.ne.s32.totalorder %s152, %s153
    %p164 = scmp.eq.s32.totalorder %s15, 0
    %p165 = por %p163, %p164
    %p166 = scmp.ne.s32.totalorder %s152, %s153
    %p167 = scmp.eq.s32.totalorder %s16, 1
    %p168 = por %p166, %p167
    %p170 = scmp.ne.s32.totalorder %s153, %s169
    %p171 = scmp.eq.s32.totalorder %s16, 0
    %p172 = por %p170, %p171
    %p173 = scmp.le.s32.totalorder 1, %s10
    %p174 = scmp.lt.s32.totalorder %s10, 3
    %p175 = pnand %p173, %p174
    %p176 = pneg %p175
    // Predicated region
    $region9: #{basic_conv2d.1} parent=5 // pred_check
      _
    $region10: #{basic_conv2d.1} parent=5 // pred_check_branch
      %178 = sbr.rel (%p175) target = $region12
    $region11: #{basic_conv2d.1} parent=5 // pred_region
      %s179 = ssub.s32 %s10, 1
      // Predicated region
      $region13: #{basic_conv2d.1} parent=11 // pred_check
        %p180 = pneg %p83
      $region14: #{basic_conv2d.1} parent=11 // pred_check_branch
        %182 = sbr.rel (%p180) target = $region16
      $region15: #{basic_conv2d.1} parent=11 // pred_region
        %p183 = scmp.lt.s32.totalorder %s22, 0
        %s184 = scalar_select %p183, %s22, 0
        %s185 = smul.addr %s184, 4
        %s186 = scalar_lea.vmem %s1, %s185
      $region16: #{basic_conv2d.1} parent=11 // pred_fallthru
        _
      // Predicated region
      $region17: #{basic_conv2d.1} parent=11 // pred_check
        %p187 = pneg %p109
      $region18: #{basic_conv2d.1} parent=11 // pred_check_branch
        %189 = sbr.rel (%p187) target = $region20
      $region19: #{basic_conv2d.1} parent=11 // pred_region
        %p190 = scmp.lt.s32.totalorder %s22, 0
        %s191 = scalar_select %p190, %s22, 0
        %s192 = scalar_lea.vmem %s2, %s191
      $region20: #{basic_conv2d.1} parent=11 // pred_fallthru
        _
      // Predicated region
      $region21: #{basic_conv2d.1} parent=11 // pred_check
        %p193 = pneg %p135
      $region22: #{basic_conv2d.1} parent=11 // pred_check_branch
        %195 = sbr.rel (%p193) target = $region24
      $region23: #{basic_conv2d.1} parent=11 // pred_region
        %p196 = scmp.lt.s32.totalorder %s22, 0
        %s197 = scalar_select %p196, %s22, 0
        %s198 = scalar_lea.vmem %s3, %s197
      $region24: #{basic_conv2d.1} parent=11 // pred_fallthru
        _
    $region12: #{basic_conv2d.1} parent=5 // pred_fallthru
      _
    %p199 = scmp.lt.s32.totalorder %s10, 2
    // Predicated region
    $region25: #{basic_conv2d.1} parent=5 // pred_check
      %p200 = pneg %p199
    $region26: #{basic_conv2d.1} parent=5 // pred_check_branch
      %202 = sbr.rel (%p200) target = $region28
    $region27: #{basic_conv2d.1} parent=5 // pred_region
      // Predicated region
      $region29: #{basic_conv2d.1} parent=27 // pred_check
        %p203 = pneg %p51
      $region30: #{basic_conv2d.1} parent=27 // pred_check_branch
        %205 = sbr.rel (%p203) target = $region32
      $region31: #{basic_conv2d.1} parent=27 // pred_region
        %s206 = smul.u32 32, %s18
        %p207 = scmp.lt.s32.totalorder %s17, 1
        %s208 = scalar_select %p207, %s17, 1
        %p209 = scmp.lt.s32.totalorder %s206, 31
        %s210 = scalar_select %p209, %s206, 31
        %s211 = smul.addr %s208, 32
        %s212 = sadd.s32 %s210, %s211
        %s213 = smul.addr %s212, 4
        %s214 = scalar_lea.vmem %s0, %s213
        %s215 = smul.u32 32, %s18
      $region32: #{basic_conv2d.1} parent=27 // pred_fallthru
        _
    $region28: #{basic_conv2d.1} parent=5 // pred_fallthru
      _
    %p216 = scmp.le.s32.totalorder 1, %s10
    %p217 = scmp.lt.s32.totalorder %s10, 3
    %p218 = pnand %p216, %p217
    %p219 = pneg %p218
    // Predicated region
    $region33: #{basic_conv2d.1} parent=5 // pred_check
      _
    $region34: #{basic_conv2d.1} parent=5 // pred_check_branch
      %221 = sbr.rel (%p218) target = $region36
    $region35: #{basic_conv2d.1} parent=5 // pred_region
      %s222 = ssub.s32 %s10, 1
      %s223 = smul.u32 32, %s21
      %p224 = scmp.lt.s32.totalorder %s20, 1
      %s225 = scalar_select %p224, %s20, 1
      %p226 = scmp.lt.s32.totalorder %s223, 31
      %s227 = scalar_select %p226, %s223, 31
      %s228 = smul.addr %s225, 32
      %s229 = sadd.s32 %s227, %s228
      %s230 = smul.addr %s229, 4
      %s231 = scalar_lea.vmem %s0, %s230
      %p232 = pneg %p57
      %p233 = pneg %p54
      %p234 = scmp.lt.s32.totalorder %s22, 0
      %s235 = scalar_select %p234, %s22, 0
      %s236 = smul.addr %s235, 4
      %s237 = scalar_lea.vmem %s1, %s236
      %p238 = pneg %p83
      %p239 = pneg %p80
      %p240 = scmp.lt.s32.totalorder %s22, 0
      %s241 = scalar_select %p240, %s22, 0
      %s242 = scalar_lea.vmem %s2, %s241
      %p243 = pneg %p109
      %p244 = pneg %p106
      %p245 = scmp.lt.s32.totalorder %s22, 0
      %s246 = scalar_select %p245, %s22, 0
      %s247 = scalar_lea.vmem %s3, %s246
      %p248 = pneg %p135
      %p249 = pneg %p132
      %p250 = pneg %p165
      %p251 = pneg %p162
      %s252 = smul.u32 32, %s21
      %p253 = scmp.lt.s32.totalorder %s20, 1
      %s254 = scalar_select %p253, %s20, 1
      %p255 = scmp.lt.s32.totalorder %s252, 31
      %s256 = scalar_select %p255, %s252, 31
      %p257 = scmp.lt.s32.totalorder %s22, 0
      %s258 = scalar_select %p257, %s22, 0
      %s259 = sadd.s32 %s258, %s256
      %s260 = smul.addr %s254, 32
      %s261 = sadd.s32 %s259, %s260
      %s262 = smul.addr %s261, 8
      %s263 = scalar_lea.vmem %s4, %s262
      %s264 = smul.u32 32, %s21
      %p265 = scmp.lt.s32.totalorder %s20, 1
      %s266 = scalar_select %p265, %s20, 1
      %p267 = scmp.lt.s32.totalorder %s264, 31
      %s268 = scalar_select %p267, %s264, 31
      %s269 = smul.addr %s266, 32
      %s270 = sadd.s32 %s268, %s269
      %s271 = smul.addr %s270, 4
      %s272 = scalar_lea.vmem %s0, %s271
      %s273 = smul.u32 32, %s21
      %p274 = scmp.lt.s32.totalorder %s22, 0
      %s275 = scalar_select %p274, %s22, 0
      %s276 = smul.addr %s275, 4
      %s277 = scalar_lea.vmem %s1, %s276
      %p278 = scmp.lt.s32.totalorder %s22, 0
      %s279 = scalar_select %p278, %s22, 0
      %s280 = scalar_lea.vmem %s2, %s279
      %p281 = scmp.lt.s32.totalorder %s22, 0
      %s282 = scalar_select %p281, %s22, 0
      %s283 = scalar_lea.vmem %s3, %s282
      %s284 = smul.u32 32, %s21
      %p285 = scmp.lt.s32.totalorder %s20, 1
      %s286 = scalar_select %p285, %s20, 1
      %p287 = scmp.lt.s32.totalorder %s284, 31
      %s288 = scalar_select %p287, %s284, 31
      %p289 = scmp.lt.s32.totalorder %s22, 0
      %s290 = scalar_select %p289, %s22, 0
      %s291 = sadd.s32 %s290, %s288
      %s292 = smul.addr %s286, 32
      %s293 = sadd.s32 %s291, %s292
      %s294 = smul.addr %s293, 8
      %s295 = scalar_lea.vmem %s4, %s294
      %s296 = smul.u32 32, %s21
      %v298 = vld [vmem:[%s272] sm:$0xf]
      %v299 = vld [vmem:[%s272 + $0x4] sm:$0xf]
      %v300 = vld [vmem:[%s272 + $0x8] sm:$0xf]
      %v301 = vld [vmem:[%s272 + $0xc] sm:$0xf]
      %v302 = vld [vmem:[%s272 + $0x10] sm:$0xf]
      %v303 = vld [vmem:[%s272 + $0x14] sm:$0xf]
      %v304 = vld [vmem:[%s272 + $0x18] sm:$0xf]
      %v305 = vld [vmem:[%s272 + $0x1c] sm:$0xf]
      %v306 = vld [vmem:[%s272 + $0x20] sm:$0xf]
      %v307 = vld [vmem:[%s272 + $0x24] sm:$0xf]
      %v308 = vld [vmem:[%s272 + $0x28] sm:$0xf]
      %v309 = vld [vmem:[%s272 + $0x2c] sm:$0xf]
      %v310 = vld [vmem:[%s272 + $0x30] sm:$0xf]
      %v311 = vld [vmem:[%s272 + $0x34] sm:$0xf]
      %v312 = vld [vmem:[%s272 + $0x38] sm:$0xf]
      %v313 = vld [vmem:[%s272 + $0x3c] sm:$0xf]
      %v314 = vld [vmem:[%s272 + $0x40] sm:$0xf]
      %v315 = vld [vmem:[%s272 + $0x44] sm:$0xf]
      %v316 = vld [vmem:[%s272 + $0x48] sm:$0xf]
      %v317 = vld [vmem:[%s272 + $0x4c] sm:$0xf]
      %v318 = vld [vmem:[%s272 + $0x50] sm:$0xf]
      %v319 = vld [vmem:[%s272 + $0x54] sm:$0xf]
      %v320 = vld [vmem:[%s272 + $0x58] sm:$0xf]
      %v321 = vld [vmem:[%s272 + $0x5c] sm:$0xf]
      %v322 = vld [vmem:[%s272 + $0x60] sm:$0xf]
      %v323 = vld [vmem:[%s272 + $0x64] sm:$0xf]
      %v324 = vld [vmem:[%s272 + $0x68] sm:$0xf]
      %v325 = vld [vmem:[%s272 + $0x6c] sm:$0xf]
      %v326 = vld [vmem:[%s272 + $0x70] sm:$0xf]
      %v327 = vld [vmem:[%s272 + $0x74] sm:$0xf]
      %v328 = vld [vmem:[%s272 + $0x78] sm:$0xf]
      %v329 = vld [vmem:[%s272 + $0x7c] sm:$0xf]
      %v330 = vld [vmem:[%s277] sm:$0xf]
      %v331 = vld [vmem:[%s277 + $0x4] sm:$0xf]
      %v332 = vld [vmem:[%s277 + $0x8] sm:$0xf]
      %v333 = vld [vmem:[%s277 + $0xc] sm:$0xf]
      %v334 = vld [vmem:[%s277 + $0x10] sm:$0xf]
      %v335 = vld [vmem:[%s277 + $0x14] sm:$0xf]
      %v336 = vld [vmem:[%s277 + $0x18] sm:$0xf]
      %v337 = vld [vmem:[%s277 + $0x1c] sm:$0xf]
      %v338 = vld [vmem:[%s277 + $0x20] sm:$0xf]
      %v339 = vld [vmem:[%s277 + $0x24] sm:$0xf]
      %v340 = vld [vmem:[%s277 + $0x28] sm:$0xf]
      %v341 = vld [vmem:[%s277 + $0x2c] sm:$0xf]
      %v342 = vld [vmem:[%s277 + $0x30] sm:$0xf]
      %v343 = vld [vmem:[%s277 + $0x34] sm:$0xf]
      %v344 = vld [vmem:[%s277 + $0x38] sm:$0xf]
      %v345 = vld [vmem:[%s277 + $0x3c] sm:$0xf]
      %v378 = vunpack.c.l.b16 %v298
      %v379 = vunpack.c.l.b16 %v299
      %v380 = vunpack.c.l.b16 %v300
      %v381 = vunpack.c.l.b16 %v301
      %v382 = vunpack.c.l.b16 %v302
      %v383 = vunpack.c.l.b16 %v303
      %v384 = vunpack.c.l.b16 %v304
      %v385 = vunpack.c.l.b16 %v305
      %v386 = vunpack.c.l.b16 %v306
      %v387 = vunpack.c.l.b16 %v307
      %v388 = vunpack.c.l.b16 %v308
      %v389 = vunpack.c.l.b16 %v309
      %v390 = vunpack.c.l.b16 %v310
      %v391 = vunpack.c.l.b16 %v311
      %v392 = vunpack.c.l.b16 %v312
      %v393 = vunpack.c.l.b16 %v313
      %v394 = vunpack.c.l.b16 %v314
      %v395 = vunpack.c.l.b16 %v315
      %v396 = vunpack.c.l.b16 %v316
      %v397 = vunpack.c.l.b16 %v317
      %v398 = vunpack.c.l.b16 %v318
      %v399 = vunpack.c.l.b16 %v319
      %v400 = vunpack.c.l.b16 %v320
      %v401 = vunpack.c.l.b16 %v321
      %v402 = vunpack.c.l.b16 %v322
      %v403 = vunpack.c.l.b16 %v323
      %v404 = vunpack.c.l.b16 %v324
      %v405 = vunpack.c.l.b16 %v325
      %v406 = vunpack.c.l.b16 %v326
      %v407 = vunpack.c.l.b16 %v327
      %v408 = vunpack.c.l.b16 %v328
      %v409 = vunpack.c.l.b16 %v329
      %v410 = vpack.c.b16 %v379, %v378
      %v411 = vpack.c.b16 %v381, %v380
      %v412 = vpack.c.b16 %v383, %v382
      %v413 = vpack.c.b16 %v385, %v384
      %v414 = vpack.c.b16 %v387, %v386
      %v415 = vpack.c.b16 %v389, %v388
      %v416 = vpack.c.b16 %v391, %v390
      %v417 = vpack.c.b16 %v393, %v392
      %v418 = vpack.c.b16 %v395, %v394
      %v419 = vpack.c.b16 %v397, %v396
      %v420 = vpack.c.b16 %v399, %v398
      %v421 = vpack.c.b16 %v401, %v400
      %v422 = vpack.c.b16 %v403, %v402
      %v423 = vpack.c.b16 %v405, %v404
      %v424 = vpack.c.b16 %v407, %v406
      %v425 = vpack.c.b16 %v409, %v408
      %v458 = vunpack.c.l.b16 %v330
      %v459 = vunpack.c.l.b16 %v331
      %v460 = vunpack.c.l.b16 %v332
      %v461 = vunpack.c.l.b16 %v333
      %v462 = vunpack.c.l.b16 %v334
      %v463 = vunpack.c.l.b16 %v335
      %v464 = vunpack.c.l.b16 %v336
      %v465 = vunpack.c.l.b16 %v337
      %v466 = vunpack.c.l.b16 %v338
      %v467 = vunpack.c.l.b16 %v339
      %v468 = vunpack.c.l.b16 %v340
      %v469 = vunpack.c.l.b16 %v341
      %v470 = vunpack.c.l.b16 %v342
      %v471 = vunpack.c.l.b16 %v343
      %v472 = vunpack.c.l.b16 %v344
      %v473 = vunpack.c.l.b16 %v345
      %v474 = vpack.c.b16 %v459, %v458
      %v475 = vpack.c.b16 %v461, %v460
      %v476 = vpack.c.b16 %v463, %v462
      %v477 = vpack.c.b16 %v465, %v464
      %v478 = vpack.c.b16 %v467, %v466
      %v479 = vpack.c.b16 %v469, %v468
      %v480 = vpack.c.b16 %v471, %v470
      %v481 = vpack.c.b16 %v473, %v472
      %490 = vmatprep.subr.bf16.mxu0 0
      %491 = vmatpush1.bf16.msra.mxu0 %v474
      %492 = vmatprep.subr.bf16.mxu0 0
      %493 = vmatpush1.bf16.msra.mxu0 %v475
      %494 = vmatprep.subr.bf16.mxu0 0
      %495 = vmatpush1.bf16.msra.mxu0 %v476
      %496 = vmatprep.subr.bf16.mxu0 0
      %497 = vmatpush1.bf16.msra.mxu0 %v477
      %498 = vmatprep.subr.bf16.mxu0 0
      %499 = vmatpush1.bf16.msra.mxu0 %v478
      %500 = vmatprep.subr.bf16.mxu0 0
      %501 = vmatpush1.bf16.msra.mxu0 %v479
      %502 = vmatprep.subr.bf16.mxu0 0
      %503 = vmatpush1.bf16.msra.mxu0 %v480
      %504 = vmatprep.subr.bf16.mxu0 0
      %505 = vmatpush1.bf16.msra.mxu0 %v481
      %506 = vmatprep.subr.bf16.mxu0 0
      %507 = vmatpush1.bf16.msra.mxu0 0
      %508 = vmatprep.subr.bf16.mxu0 0
      %509 = vmatpush1.bf16.msra.mxu0 0
      %510 = vmatprep.subr.bf16.mxu0 0
      %511 = vmatpush1.bf16.msra.mxu0 0
      %512 = vmatprep.subr.bf16.mxu0 0
      %513 = vmatpush1.bf16.msra.mxu0 0
      %514 = vmatprep.subr.bf16.mxu0 0
      %515 = vmatpush1.bf16.msra.mxu0 0
      %516 = vmatprep.subr.bf16.mxu0 0
      %517 = vmatpush1.bf16.msra.mxu0 0
      %518 = vmatprep.subr.bf16.mxu0 0
      %519 = vmatpush1.bf16.msra.mxu0 0
      %520 = vmatprep.subr.bf16.mxu0 0
      %521 = vmatpush1.bf16.msra.mxu0 0
      %522 = vmatprep.mubr.bf16.mxu0 0
      %523 = vmatmul.mubr.bf16.gmra.mrb[0].mxu0 %v410
      %v524 = vpop.f32.mrb[0].mxu0
      %v525 = vadd.f32 0.0, %v524
      %v526 = vpop.f32.mrb[0].mxu0
      %v527 = vpop.f32.mrb[0].mxu0
      %v528 = vadd.f32 0.0, %v527
      %v529 = vpop.f32.mrb[0].mxu0
      %530 = vmatprep.mubr.bf16.mxu0 0
      %531 = vmatmul.mubr.bf16.gmra.mrb[0].mxu0 %v411
      %v532 = vpop.f32.mrb[0].mxu0
      %v533 = vadd.f32 0.0, %v532
      %v534 = vpop.f32.mrb[0].mxu0
      %v535 = vpop.f32.mrb[0].mxu0
      %v536 = vadd.f32 0.0, %v535
      %v537 = vpop.f32.mrb[0].mxu0
      %538 = vmatprep.mubr.bf16.mxu0 0
      %539 = vmatmul.mubr.bf16.gmra.mrb[0].mxu0 %v412
      %v540 = vpop.f32.mrb[0].mxu0
      %v541 = vadd.f32 0.0, %v540
      %v542 = vpop.f32.mrb[0].mxu0
      %v543 = vpop.f32.mrb[0].mxu0
      %v544 = vadd.f32 0.0, %v543
      %v545 = vpop.f32.mrb[0].mxu0
      %546 = vmatprep.mubr.bf16.mxu0 0
      %547 = vmatmul.mubr.bf16.gmra.mrb[0].mxu0 %v413
      %v548 = vpop.f32.mrb[0].mxu0
      %v549 = vadd.f32 0.0, %v548
      %v550 = vpop.f32.mrb[0].mxu0
      %v551 = vpop.f32.mrb[0].mxu0
      %v552 = vadd.f32 0.0, %v551
      %v553 = vpop.f32.mrb[0].mxu0
      %554 = vmatprep.mubr.bf16.mxu0 0
      %555 = vmatmul.mubr.bf16.gmra.mrb[0].mxu0 %v414
      %v556 = vpop.f32.mrb[0].mxu0
      %v557 = vadd.f32 0.0, %v556
      %v558 = vpop.f32.mrb[0].mxu0
      %v559 = vpop.f32.mrb[0].mxu0
      %v560 = vadd.f32 0.0, %v559
      %v561 = vpop.f32.mrb[0].mxu0
      %562 = vmatprep.mubr.bf16.mxu0 0
      %563 = vmatmul.mubr.bf16.gmra.mrb[0].mxu0 %v415
      %v564 = vpop.f32.mrb[0].mxu0
      %v565 = vadd.f32 0.0, %v564
      %v566 = vpop.f32.mrb[0].mxu0
      %v567 = vpop.f32.mrb[0].mxu0
      %v568 = vadd.f32 0.0, %v567
      %v569 = vpop.f32.mrb[0].mxu0
      %570 = vmatprep.mubr.bf16.mxu0 0
      %571 = vmatmul.mubr.bf16.gmra.mrb[0].mxu0 %v416
      %v572 = vpop.f32.mrb[0].mxu0
      %v573 = vadd.f32 0.0, %v572
      %v574 = vpop.f32.mrb[0].mxu0
      %v575 = vpop.f32.mrb[0].mxu0
      %v576 = vadd.f32 0.0, %v575
      %v577 = vpop.f32.mrb[0].mxu0
      %578 = vmatprep.mubr.bf16.mxu0 0
      %579 = vmatmul.mubr.bf16.gmra.mrb[0].mxu0 %v417
      %v580 = vpop.f32.mrb[0].mxu0
      %v581 = vadd.f32 0.0, %v580
      %v582 = vpop.f32.mrb[0].mxu0
      %v583 = vpop.f32.mrb[0].mxu0
      %v584 = vadd.f32 0.0, %v583
      %v585 = vpop.f32.mrb[0].mxu0
      %586 = vmatprep.mubr.bf16.mxu0 0
      %587 = vmatmul.mubr.bf16.gmra.mrb[0].mxu0 %v418
      %v588 = vpop.f32.mrb[0].mxu0
      %v589 = vadd.f32 0.0, %v588
      %v590 = vpop.f32.mrb[0].mxu0
      %v591 = vpop.f32.mrb[0].mxu0
      %v592 = vadd.f32 0.0, %v591
      %v593 = vpop.f32.mrb[0].mxu0
      %594 = vmatprep.mubr.bf16.mxu0 0
      %595 = vmatmul.mubr.bf16.gmra.mrb[0].mxu0 %v419
      %v596 = vpop.f32.mrb[0].mxu0
      %v597 = vadd.f32 0.0, %v596
      %v598 = vpop.f32.mrb[0].mxu0
      %v599 = vpop.f32.mrb[0].mxu0
      %v600 = vadd.f32 0.0, %v599
      %v601 = vpop.f32.mrb[0].mxu0
      %602 = vmatprep.mubr.bf16.mxu0 0
      %603 = vmatmul.mubr.bf16.gmra.mrb[0].mxu0 %v420
      %v604 = vpop.f32.mrb[0].mxu0
      %v605 = vadd.f32 0.0, %v604
      %v606 = vpop.f32.mrb[0].mxu0
      %v607 = vpop.f32.mrb[0].mxu0
      %v608 = vadd.f32 0.0, %v607
      %v609 = vpop.f32.mrb[0].mxu0
      %610 = vmatprep.mubr.bf16.mxu0 0
      %611 = vmatmul.mubr.bf16.gmra.mrb[0].mxu0 %v421
      %v612 = vpop.f32.mrb[0].mxu0
      %v613 = vadd.f32 0.0, %v612
      %v614 = vpop.f32.mrb[0].mxu0
      %v615 = vpop.f32.mrb[0].mxu0
      %v616 = vadd.f32 0.0, %v615
      %v617 = vpop.f32.mrb[0].mxu0
      %618 = vmatprep.mubr.bf16.mxu0 0
      %619 = vmatmul.mubr.bf16.gmra.mrb[0].mxu0 %v422
      %v620 = vpop.f32.mrb[0].mxu0
      %v621 = vadd.f32 0.0, %v620
      %v622 = vpop.f32.mrb[0].mxu0
      %v623 = vpop.f32.mrb[0].mxu0
      %v624 = vadd.f32 0.0, %v623
      %v625 = vpop.f32.mrb[0].mxu0
      %626 = vmatprep.mubr.bf16.mxu0 0
      %627 = vmatmul.mubr.bf16.gmra.mrb[0].mxu0 %v423
      %v628 = vpop.f32.mrb[0].mxu0
      %v629 = vadd.f32 0.0, %v628
      %v630 = vpop.f32.mrb[0].mxu0
      %v631 = vpop.f32.mrb[0].mxu0
      %v632 = vadd.f32 0.0, %v631
      %v633 = vpop.f32.mrb[0].mxu0
      %634 = vmatprep.mubr.bf16.mxu0 0
      %635 = vmatmul.mubr.bf16.gmra.mrb[0].mxu0 %v424
      %v636 = vpop.f32.mrb[0].mxu0
      %v637 = vadd.f32 0.0, %v636
      %v638 = vpop.f32.mrb[0].mxu0
      %v639 = vpop.f32.mrb[0].mxu0
      %v640 = vadd.f32 0.0, %v639
      %v641 = vpop.f32.mrb[0].mxu0
      %642 = vmatprep.mubr.bf16.mxu0 0
      %643 = vmatmul.mubr.bf16.gmra.mrb[0].mxu0 %v425
      %v644 = vpop.f32.mrb[0].mxu0
      %v645 = vadd.f32 0.0, %v644
      %v646 = vpop.f32.mrb[0].mxu0
      %v647 = vpop.f32.mrb[0].mxu0
      %v648 = vadd.f32 0.0, %v647
      %v649 = vpop.f32.mrb[0].mxu0
      %650 = vdwg.mxu0
      %v651 = vld [vmem:[%s280] sm:$0x1]
      %v653 = vlaneseq
      %v654 = vshrl.u32 %v653, 7
      %v655 = vsub.s32 0, %v654
      %v656 = vrot.slane %v651, %v655
      %v658 = vmul.f32 %v525, %v656
      %v659 = vmul.f32 %v528, %v656
      %v660 = vmul.f32 %v533, %v656
      %v661 = vmul.f32 %v536, %v656
      %v662 = vmul.f32 %v541, %v656
      %v663 = vmul.f32 %v544, %v656
      %v664 = vmul.f32 %v549, %v656
      %v665 = vmul.f32 %v552, %v656
      %v666 = vmul.f32 %v557, %v656
      %v667 = vmul.f32 %v560, %v656
      %v668 = vmul.f32 %v565, %v656
      %v669 = vmul.f32 %v568, %v656
      %v670 = vmul.f32 %v573, %v656
      %v671 = vmul.f32 %v576, %v656
      %v672 = vmul.f32 %v581, %v656
      %v673 = vmul.f32 %v584, %v656
      %v674 = vmul.f32 %v589, %v656
      %v675 = vmul.f32 %v592, %v656
      %v676 = vmul.f32 %v597, %v656
      %v677 = vmul.f32 %v600, %v656
      %v678 = vmul.f32 %v605, %v656
      %v679 = vmul.f32 %v608, %v656
      %v680 = vmul.f32 %v613, %v656
      %v681 = vmul.f32 %v616, %v656
      %v682 = vmul.f32 %v621, %v656
      %v683 = vmul.f32 %v624, %v656
      %v684 = vmul.f32 %v629, %v656
      %v685 = vmul.f32 %v632, %v656
      %v686 = vmul.f32 %v637, %v656
      %v687 = vmul.f32 %v640, %v656
      %v688 = vmul.f32 %v645, %v656
      %v689 = vmul.f32 %v648, %v656
      %v690 = vld [vmem:[%s283] sm:$0x1]
      %v692 = vlaneseq
      %v693 = vshrl.u32 %v692, 7
      %v694 = vsub.s32 0, %v693
      %v695 = vrot.slane %v690, %v694
      %v697 = vadd.f32 %v658, %v695
      %v698 = vadd.f32 %v659, %v695
      %v699 = vadd.f32 %v660, %v695
      %v700 = vadd.f32 %v661, %v695
      %v701 = vadd.f32 %v662, %v695
      %v702 = vadd.f32 %v663, %v695
      %v703 = vadd.f32 %v664, %v695
      %v704 = vadd.f32 %v665, %v695
      %v705 = vadd.f32 %v666, %v695
      %v706 = vadd.f32 %v667, %v695
      %v707 = vadd.f32 %v668, %v695
      %v708 = vadd.f32 %v669, %v695
      %v709 = vadd.f32 %v670, %v695
      %v710 = vadd.f32 %v671, %v695
      %v711 = vadd.f32 %v672, %v695
      %v712 = vadd.f32 %v673, %v695
      %v713 = vadd.f32 %v674, %v695
      %v714 = vadd.f32 %v675, %v695
      %v715 = vadd.f32 %v676, %v695
      %v716 = vadd.f32 %v677, %v695
      %v717 = vadd.f32 %v678, %v695
      %v718 = vadd.f32 %v679, %v695
      %v719 = vadd.f32 %v680, %v695
      %v720 = vadd.f32 %v681, %v695
      %v721 = vadd.f32 %v682, %v695
      %v722 = vadd.f32 %v683, %v695
      %v723 = vadd.f32 %v684, %v695
      %v724 = vadd.f32 %v685, %v695
      %v725 = vadd.f32 %v686, %v695
      %v726 = vadd.f32 %v687, %v695
      %v727 = vadd.f32 %v688, %v695
      %v728 = vadd.f32 %v689, %v695
      %v729 = vmax.f32 %v697, 0.0
      %v730 = vmax.f32 %v698, 0.0
      %v731 = vmax.f32 %v699, 0.0
      %v732 = vmax.f32 %v700, 0.0
      %v733 = vmax.f32 %v701, 0.0
      %v734 = vmax.f32 %v702, 0.0
      %v735 = vmax.f32 %v703, 0.0
      %v736 = vmax.f32 %v704, 0.0
      %v737 = vmax.f32 %v705, 0.0
      %v738 = vmax.f32 %v706, 0.0
      %v739 = vmax.f32 %v707, 0.0
      %v740 = vmax.f32 %v708, 0.0
      %v741 = vmax.f32 %v709, 0.0
      %v742 = vmax.f32 %v710, 0.0
      %v743 = vmax.f32 %v711, 0.0
      %v744 = vmax.f32 %v712, 0.0
      %v745 = vmax.f32 %v713, 0.0
      %v746 = vmax.f32 %v714, 0.0
      %v747 = vmax.f32 %v715, 0.0
      %v748 = vmax.f32 %v716, 0.0
      %v749 = vmax.f32 %v717, 0.0
      %v750 = vmax.f32 %v718, 0.0
      %v751 = vmax.f32 %v719, 0.0
      %v752 = vmax.f32 %v720, 0.0
      %v753 = vmax.f32 %v721, 0.0
      %v754 = vmax.f32 %v722, 0.0
      %v755 = vmax.f32 %v723, 0.0
      %v756 = vmax.f32 %v724, 0.0
      %v757 = vmax.f32 %v725, 0.0
      %v758 = vmax.f32 %v726, 0.0
      %v759 = vmax.f32 %v727, 0.0
      %v760 = vmax.f32 %v728, 0.0
      %761 = vst [vmem:[%s295] sm:$0xff] %v729
      %762 = vst [vmem:[%s295 + $0x8] sm:$0xff] %v730
      %763 = vst [vmem:[%s295 + $0x10] sm:$0xff] %v731
      %764 = vst [vmem:[%s295 + $0x18] sm:$0xff] %v732
      %765 = vst [vmem:[%s295 + $0x20] sm:$0xff] %v733
      %766 = vst [vmem:[%s295 + $0x28] sm:$0xff] %v734
      %767 = vst [vmem:[%s295 + $0x30] sm:$0xff] %v735
      %768 = vst [vmem:[%s295 + $0x38] sm:$0xff] %v736
      %769 = vst [vmem:[%s295 + $0x40] sm:$0xff] %v737
      %770 = vst [vmem:[%s295 + $0x48] sm:$0xff] %v738
      %771 = vst [vmem:[%s295 + $0x50] sm:$0xff] %v739
      %772 = vst [vmem:[%s295 + $0x58] sm:$0xff] %v740
      %773 = vst [vmem:[%s295 + $0x60] sm:$0xff] %v741
      %774 = vst [vmem:[%s295 + $0x68] sm:$0xff] %v742
      %775 = vst [vmem:[%s295 + $0x70] sm:$0xff] %v743
      %776 = vst [vmem:[%s295 + $0x78] sm:$0xff] %v744
      %777 = vst [vmem:[%s295 + $0x80] sm:$0xff] %v745
      %778 = vst [vmem:[%s295 + $0x88] sm:$0xff] %v746
      %779 = vst [vmem:[%s295 + $0x90] sm:$0xff] %v747
      %780 = vst [vmem:[%s295 + $0x98] sm:$0xff] %v748
      %781 = vst [vmem:[%s295 + $0xa0] sm:$0xff] %v749
      %782 = vst [vmem:[%s295 + $0xa8] sm:$0xff] %v750
      %783 = vst [vmem:[%s295 + $0xb0] sm:$0xff] %v751
      %784 = vst [vmem:[%s295 + $0xb8] sm:$0xff] %v752
      %785 = vst [vmem:[%s295 + $0xc0] sm:$0xff] %v753
      %786 = vst [vmem:[%s295 + $0xc8] sm:$0xff] %v754
      %787 = vst [vmem:[%s295 + $0xd0] sm:$0xff] %v755
      %788 = vst [vmem:[%s295 + $0xd8] sm:$0xff] %v756
      %789 = vst [vmem:[%s295 + $0xe0] sm:$0xff] %v757
      %790 = vst [vmem:[%s295 + $0xe8] sm:$0xff] %v758
      %791 = vst [vmem:[%s295 + $0xf0] sm:$0xff] %v759
      %792 = vst [vmem:[%s295 + $0xf8] sm:$0xff] %v760
      %s793 = smul.u32 32, %s21
      %p794 = scmp.lt.s32.totalorder %s20, 1
      %s795 = scalar_select %p794, %s20, 1
      %p796 = scmp.lt.s32.totalorder %s793, 31
      %s797 = scalar_select %p796, %s793, 31
      %p798 = scmp.lt.s32.totalorder %s22, 0
      %s799 = scalar_select %p798, %s22, 0
      %s800 = sadd.s32 %s799, %s797
      %s801 = smul.addr %s795, 32
      %s802 = sadd.s32 %s800, %s801
      %s803 = smul.addr %s802, 8
      %s804 = scalar_lea.vmem %s4, %s803
      // Predicated region
      $region37: #{basic_conv2d.1} parent=35 // pred_check
        %p805 = pneg %p162
      $region38: #{basic_conv2d.1} parent=35 // pred_check_branch
        %807 = sbr.rel (%p805) target = $region40
      $region39: #{basic_conv2d.1} parent=35 // pred_region
        %s808 = smul.u32 32, %s21
      $region40: #{basic_conv2d.1} parent=35 // pred_fallthru
        _
    $region36: #{basic_conv2d.1} parent=5 // pred_fallthru
      _
    %p809 = scmp.le.s32.totalorder 2, %s10
    // Predicated region
    $region41: #{basic_conv2d.1} parent=5 // pred_check
      %p810 = pneg %p809
    $region42: #{basic_conv2d.1} parent=5 // pred_check_branch
      %812 = sbr.rel (%p810) target = $region44
    $region43: #{basic_conv2d.1} parent=5 // pred_region
      %s813 = ssub.s32 %s10, 2
      // Predicated region
      $region45: #{basic_conv2d.1} parent=43 // pred_check
        %p814 = pneg %p168
      $region46: #{basic_conv2d.1} parent=43 // pred_check_branch
        %816 = sbr.rel (%p814) target = $region48
      $region47: #{basic_conv2d.1} parent=43 // pred_region
        %s817 = smul.u32 32, %s24
        %p818 = scmp.lt.s32.totalorder %s23, 1
        %s819 = scalar_select %p818, %s23, 1
        %p820 = scmp.lt.s32.totalorder %s817, 31
        %s821 = scalar_select %p820, %s817, 31
        %p822 = scmp.lt.s32.totalorder %s25, 0
        %s823 = scalar_select %p822, %s25, 0
        %s824 = sadd.s32 %s823, %s821
        %s825 = smul.addr %s819, 32
        %s826 = sadd.s32 %s824, %s825
        %s827 = smul.addr %s826, 8
        %s828 = scalar_lea.vmem %s4, %s827
      $region48: #{basic_conv2d.1} parent=43 // pred_fallthru
        _
    $region44: #{basic_conv2d.1} parent=5 // pred_fallthru
      _
  $region6: #{basic_conv2d.1} parent=0 // loop_footer
    %s14 = sadd.s32 1, %s10
  $region7: #{basic_conv2d.1} parent=0 // loop_footer_branch
    %9 = sbr.rel target = $region3
  $region8: #{basic_conv2d.1} parent=0 // loop_exit
    _

</llo_original>
